<compile_context>
chip_gen: v6e
topology: v6e:2x2x1
jax: 0.10.0
libtpu: 0.0.40
codegen_flags: <defaults>
</compile_context>

<pallas_src>
import jax
import jax.numpy as jnp
from jax.experimental import pallas as pl
from jax.experimental.pallas import tpu as pltpu


def _round_up(x, m):
    return ((x + m - 1) // m) * m


def _linear_kernel(x_ref, w_ref, b_ref, o_ref):
    # x_ref: [TM, E], w_ref: [E, Cp], b_ref: [1, Cp], o_ref: [TM, Cp]
    acc = jnp.dot(x_ref[...], w_ref[...], preferred_element_type=jnp.float32)
    o_ref[...] = (acc + b_ref[...]).astype(o_ref.dtype)


@jax.jit
def bert_token_classification_head(sequence_output, attention_mask, weight, bias):
    """Pallas implementation of BertTokenClassificationHead.forward.

    Args:
      sequence_output: [B, S, E] float array.
      attention_mask:  passed through unchanged.
      weight:          [C, E] (PyTorch nn.Linear layout).
      bias:            [C].

    Returns:
      (logits [B, S, C], attention_mask)
    """
    B, S, E = sequence_output.shape
    C = weight.shape[0]
    dtype = sequence_output.dtype

    M = B * S

    # Token-tile size: 512 rows for big inputs, otherwise the (16-aligned)
    # full M.  16 alignment satisfies both f32 (sublane=8) and bf16 (packed=16).
    ALIGN = 16
    TM = 512 if M >= 512 else _round_up(M, ALIGN)
    M_pad = _round_up(M, TM)

    # Lane-dense output: pad the (tiny) class dim up to a multiple of 128.
    C_pad = _round_up(C, 128)

    x2d = sequence_output.reshape(M, E)
    if M_pad != M:
        x2d = jnp.pad(x2d, ((0, M_pad - M), (0, 0)))

    # Glue: [E, C_pad] weight and [1, C_pad] bias (zero-padded columns).
    # Under jit these transposes/pads are constant-folded with the params.
    w_t = jnp.zeros((E, C_pad), dtype=dtype).at[:, :C].set(weight.T.astype(dtype))
    b2d = jnp.zeros((1, C_pad), dtype=jnp.float32).at[:, :C].set(
        bias.astype(jnp.float32))

    itemsize = jnp.dtype(dtype).itemsize
    cost = pl.CostEstimate(
        flops=2 * M_pad * E * C_pad,
        transcendentals=0,
        bytes_accessed=(M_pad * E + E * C_pad + M_pad * C_pad) * itemsize,
    )

    grid = (M_pad // TM,)
    out2d = pl.pallas_call(
        _linear_kernel,
        out_shape=jax.ShapeDtypeStruct((M_pad, C_pad), dtype),
        grid=grid,
        in_specs=[
            pl.BlockSpec((TM, E), lambda i: (i, 0)),      # streamed token tiles
            pl.BlockSpec((E, C_pad), lambda i: (0, 0)),   # weight: VMEM-resident
            pl.BlockSpec((1, C_pad), lambda i: (0, 0)),   # bias:   VMEM-resident
        ],
        out_specs=pl.BlockSpec((TM, C_pad), lambda i: (i, 0)),
        compiler_params=pltpu.CompilerParams(
            dimension_semantics=("parallel",),            # shard tiles on v7x's 2 TCs
        ),
        cost_estimate=cost,
    )(x2d, w_t, b2d)

    logits = out2d[:M, :C].reshape(B, S, C)
    return logits, attention_mask


if __name__ == "__main__":
    # Small shapes consistent with the module's forward:
    # batch=2, seq=8, emb_size=32, cardinality=8
    B, S, E, C = 2, 8, 32, 8

    key = jax.random.PRNGKey(0)
    k_x, k_w, k_b = jax.random.split(key, 3)

    sequence_output = jax.random.normal(k_x, (B, S, E), dtype=jnp.float32)
    attention_mask = jnp.ones((B, S), dtype=jnp.int32)

    # Deterministic parameter init (shapes follow nn.Linear(emb_size, cardinality)).
    bound = 1.0 / (E ** 0.5)
    weight = jax.random.uniform(k_w, (C, E), minval=-bound, maxval=bound,
                                dtype=jnp.float32)
    bias = jax.random.uniform(k_b, (C,), minval=-bound, maxval=bound,
                              dtype=jnp.float32)

    logits, mask_out = bert_token_classification_head(
        sequence_output, attention_mask, weight, bias)
    logits = jax.block_until_ready(logits)
    mask_out = jax.block_until_ready(mask_out)

    # Reference check in plain JAX.
    ref = sequence_output @ weight.T + bias
    assert logits.shape == (B, S, C)
    assert jnp.allclose(logits, ref, atol=1e-5, rtol=1e-5)
    assert (mask_out == attention_mask).all()

    print("KERNEL_OK")
</pallas_src>

<mosaic_0001>
module attributes {stable_mosaic.version = 11 : i64} {
  func.func @_linear_kernel(%arg0: i32, %arg1: memref<16x32xf32, #tpu.memory_space<vmem>>, %arg2: memref<32x128xf32, #tpu.memory_space<vmem>>, %arg3: memref<1x128xf32, #tpu.memory_space<vmem>>, %arg4: memref<16x128xf32, #tpu.memory_space<vmem>>) attributes {dimension_semantics = [#tpu.dimension_semantics<parallel>], iteration_bounds = array<i64: 1>, scalar_prefetch = 0 : i64, scratch_operands = 0 : i64, tpu.core_type = #tpu.core_type<tc>, window_params = [{transform_indices = @transform_0, window_bounds = array<i64: 16, 32>}, {pipeline_mode = #tpu.pipeline_mode<synchronous>, transform_indices = @transform_1, window_bounds = array<i64: 32, 128>}, {pipeline_mode = #tpu.pipeline_mode<synchronous>, transform_indices = @transform_2, window_bounds = array<i64: 1, 128>}, {transform_indices = @transform_3, window_bounds = array<i64: 16, 128>}]} {
    %c0 = arith.constant 0 : index
    %c0_0 = arith.constant 0 : index
    %0 = vector.load %arg1[%c0, %c0_0] : memref<16x32xf32, #tpu.memory_space<vmem>>, vector<16x32xf32>
    %c0_1 = arith.constant 0 : index
    %c0_2 = arith.constant 0 : index
    %1 = vector.load %arg2[%c0_1, %c0_2] : memref<32x128xf32, #tpu.memory_space<vmem>>, vector<32x128xf32>
    %cst = arith.constant dense<0.000000e+00> : vector<16x128xf32>
    %2 = tpu.matmul %0, %1, %cst {dimension_numbers = #tpu.dot_dimension_numbers<[1], [0], [0], [1], [0, 0, 1, 1], [], []>} : vector<16x32xf32>, vector<32x128xf32>, vector<16x128xf32> -> vector<16x128xf32>
    %c0_3 = arith.constant 0 : index
    %c0_4 = arith.constant 0 : index
    %3 = vector.load %arg3[%c0_3, %c0_4] : memref<1x128xf32, #tpu.memory_space<vmem>>, vector<1x128xf32>
    %4 = vector.broadcast %3 : vector<1x128xf32> to vector<16x128xf32>
    %5 = arith.addf %2, %4 : vector<16x128xf32>
    %c0_5 = arith.constant 0 : index
    %c0_6 = arith.constant 0 : index
    %6 = vector.load %arg4[%c0_5, %c0_6] : memref<16x128xf32, #tpu.memory_space<vmem>>, vector<16x128xf32>
    tpu.vector_store %arg4[%c0_5, %c0_6], %5 {strides = array<i32>} : memref<16x128xf32, #tpu.memory_space<vmem>>, vector<16x128xf32>,
    return
  }
  func.func @transform_0(%arg0: i32) -> (i32, i32) {
    %c0_i32 = arith.constant 0 : i32
    %c0_i32_0 = arith.constant 0 : i32
    return %arg0, %c0_i32 : i32, i32
  }
  func.func @transform_1(%arg0: i32) -> (i32, i32) {
    %c0_i32 = arith.constant 0 : i32
    %c0_i32_0 = arith.constant 0 : i32
    %c0_i32_1 = arith.constant 0 : i32
    return %c0_i32, %c0_i32_0 : i32, i32
  }
  func.func @transform_2(%arg0: i32) -> (i32, i32) {
    %c0_i32 = arith.constant 0 : i32
    %c0_i32_0 = arith.constant 0 : i32
    %c0_i32_1 = arith.constant 0 : i32
    return %c0_i32, %c0_i32_0 : i32, i32
  }
  func.func @transform_3(%arg0: i32) -> (i32, i32) {
    %c0_i32 = arith.constant 0 : i32
    %c0_i32_0 = arith.constant 0 : i32
    return %arg0, %c0_i32 : i32, i32
  }
}

</mosaic_0001>

<llo_original>
// kernel: bert_token_classification_head.1
$region0: #{bert_token_classification_head.1}
  #allocation0 [shape = 'u32[]', space=smem, size = 0x4, offset = 0x4, fixed_abs, tag = 'smem constant byte address 0x4 - core index']
  #allocation1 [shape = 'u32[144,128]{1,0:T(1,128)}', space=vmem, size = 0x12000, scoped, tag = 'internal scratch']
  %s0 = inlined_call_operand.vmem [shape: f32[16,32], index: 0, kind: input, shape index: {}]
  %s1 = inlined_call_operand.vmem [shape: f32[32,128], index: 1, kind: input, shape index: {}]
  %s2 = inlined_call_operand.vmem [shape: f32[1,128], index: 2, kind: input, shape index: {}]
  %s3 = inlined_call_operand.vmem [shape: f32[16,128], index: 3, kind: output, shape index: {}]
  %s4 = sld [smem:[#allocation0]]
  $region22: #{bert_token_classification_head.1} parent=0
    _
  %s6 = ssub.s32 1, %s4
  %s7 = scalar_select 0, %s6, %s4
  // Predicated region
  $region2: #{bert_token_classification_head.1} parent=0 // pred_check
    _
  $region3: #{bert_token_classification_head.1} parent=0 // pred_check_branch
    %9 = sbr.rel (0) target = $region5
  $region4: #{bert_token_classification_head.1} parent=0 // pred_region
    _
  $region5: #{bert_token_classification_head.1} parent=0 // pred_fallthru
    _
  // Predicated region
  $region6: #{bert_token_classification_head.1} parent=0 // pred_check
    _
  $region7: #{bert_token_classification_head.1} parent=0 // pred_check_branch
    %11 = sbr.rel (0) target = $region9
  $region8: #{bert_token_classification_head.1} parent=0 // pred_region
    _
  $region9: #{bert_token_classification_head.1} parent=0 // pred_fallthru
    _
  // Predicated region
  $region10: #{bert_token_classification_head.1} parent=0 // pred_check
    _
  $region11: #{bert_token_classification_head.1} parent=0 // pred_check_branch
    %13 = sbr.rel (0) target = $region13
  $region12: #{bert_token_classification_head.1} parent=0 // pred_region
    _
  $region13: #{bert_token_classification_head.1} parent=0 // pred_fallthru
    _
  %v14 = vld [vmem:[%s0] sm:$0xff]
  %v15 = vld [vmem:[%s0 + $0x8] sm:$0xff]
  %v16 = vld [vmem:[%s1] sm:$0xff]
  %v17 = vld [vmem:[%s1 + $0x8] sm:$0xff]
  %v18 = vld [vmem:[%s1 + $0x10] sm:$0xff]
  %v19 = vld [vmem:[%s1 + $0x18] sm:$0xff]
  %v20 = vld [vmem:[%s2] sm:$0x1]
  %v22 = vlaneseq
  %v23 = vshrl.u32 %v22, 7
  %v24 = vsub.s32 0, %v23
  %v25 = vrot.slane %v20, %v24
  %vm27 = vcmask 261120
  %v29 = vsel %vm27, %v14, 0
  %v32 = vsel %vm27, %v15, 0
  %34 = vmatprep.subr.mxu0 0.0
  %35 = vmatpush1.msra.mxu0 0.0
  %36 = vmatprep.subr.mxu0 0.0
  %37 = vmatpush1.msra.mxu0 0.0
  %38 = vmatprep.subr.mxu0 0.0
  %39 = vmatpush1.msra.mxu0 0.0
  %40 = vmatprep.subr.mxu0 0.0
  %41 = vmatpush1.msra.mxu0 0.0
  %42 = vmatprep.subr.mxu0 0.0
  %43 = vmatpush1.msra.mxu0 0.0
  %44 = vmatprep.subr.mxu0 0.0
  %45 = vmatpush1.msra.mxu0 0.0
  %46 = vmatprep.subr.mxu0 0.0
  %47 = vmatpush1.msra.mxu0 0.0
  %48 = vmatprep.subr.mxu0 0.0
  %49 = vmatpush1.msra.mxu0 0.0
  %50 = vmatprep.subr.mxu0 0.0
  %51 = vmatpush1.msra.mxu0 0.0
  %52 = vmatprep.subr.mxu0 0.0
  %53 = vmatpush1.msra.mxu0 0.0
  %54 = vmatprep.subr.mxu0 0.0
  %55 = vmatpush1.msra.mxu0 0.0
  %56 = vmatprep.subr.mxu0 0.0
  %57 = vmatpush1.msra.mxu0 0.0
  %58 = vmatprep.subr.mxu0 0.0
  %59 = vmatpush1.msra.mxu0 %v19
  %60 = vmatprep.subr.mxu0 0.0
  %61 = vmatpush1.msra.mxu0 %v18
  %62 = vmatprep.subr.mxu0 0.0
  %63 = vmatpush1.msra.mxu0 %v17
  %64 = vmatprep.subr.mxu0 0.0
  %65 = vmatpush1.msra.mxu0 %v16
  %66 = vmatprep.subr.mxu0 0.0
  %67 = vmatpush2.msra.mxu0 0.0
  %68 = vmatprep.subr.mxu0 0.0
  %69 = vmatpush2.msra.mxu0 0.0
  %70 = vmatprep.subr.mxu0 0.0
  %71 = vmatpush2.msra.mxu0 0.0
  %72 = vmatprep.subr.mxu0 0.0
  %73 = vmatpush2.msra.mxu0 0.0
  %74 = vmatprep.subr.mxu0 0.0
  %75 = vmatpush2.msra.mxu0 0.0
  %76 = vmatprep.subr.mxu0 0.0
  %77 = vmatpush2.msra.mxu0 0.0
  %78 = vmatprep.subr.mxu0 0.0
  %79 = vmatpush2.msra.mxu0 0.0
  %80 = vmatprep.subr.mxu0 0.0
  %81 = vmatpush2.msra.mxu0 0.0
  %82 = vmatprep.subr.mxu0 0.0
  %83 = vmatpush2.msra.mxu0 0.0
  %84 = vmatprep.subr.mxu0 0.0
  %85 = vmatpush2.msra.mxu0 0.0
  %86 = vmatprep.subr.mxu0 0.0
  %87 = vmatpush2.msra.mxu0 0.0
  %88 = vmatprep.subr.mxu0 0.0
  %89 = vmatpush2.msra.mxu0 0.0
  %90 = vmatprep.subr.mxu0 0.0
  %91 = vmatpush2.msra.mxu0 0.0
  %92 = vmatprep.subr.mxu0 0.0
  %93 = vmatpush2.msra.mxu0 0.0
  %94 = vmatprep.subr.mxu0 0.0
  %95 = vmatpush2.msra.mxu0 0.0
  %96 = vmatprep.subr.mxu0 0.0
  %97 = vmatpush2.msra.mxu0 0.0
  %98 = vmatprep.mubr.f32.mxu0 0.0
  %99 = vmatmul.mubr.f32.gmra.mxu0 %v29
  %v100 = vpop.f32.mrf.mxu0
  %v101 = vadd.f32 %v25, %v100
  %v102 = vpop.f32.mrf.mxu0
  %103 = vmatprep.mubr.f32.mxu0 0.0
  %104 = vmatmul.mubr.f32.gmra.mxu0 %v32
  %v105 = vpop.f32.mrf.mxu0
  %v106 = vadd.f32 %v25, %v105
  %v107 = vpop.f32.mrf.mxu0
  %108 = vdwg.mxu0
  %109 = vst [vmem:[%s3] sm:$0xff] %v101
  %110 = vst [vmem:[%s3 + $0x8] sm:$0xff] %v106
  // Predicated region
  $region14: #{bert_token_classification_head.1} parent=0 // pred_check
    _
  $region15: #{bert_token_classification_head.1} parent=0 // pred_check_branch
    %112 = sbr.rel (0) target = $region17
  $region16: #{bert_token_classification_head.1} parent=0 // pred_region
    _
  $region17: #{bert_token_classification_head.1} parent=0 // pred_fallthru
    _
  // Predicated region
  $region18: #{bert_token_classification_head.1} parent=0 // pred_check
    _
  $region19: #{bert_token_classification_head.1} parent=0 // pred_check_branch
    %114 = sbr.rel (0) target = $region21
  $region20: #{bert_token_classification_head.1} parent=0 // pred_region
    _
  $region21: #{bert_token_classification_head.1} parent=0 // pred_fallthru
    _

</llo_original>
